<compile_context>
chip_gen: v5e
topology: v5e:2x2
jax: 0.10.0
libtpu: 0.0.40
codegen_flags: <defaults>
</compile_context>

<pallas_src>
import jax
import jax.numpy as jnp
import numpy as np
from jax.experimental import pallas as pl
from jax.experimental.pallas import tpu as pltpu

SEG = 128  # lane-aligned stride for each packed bias segment


# ----------------------------- Pallas kernel ---------------------------------

def agent_kernel(x_ref, wxall_ref, wc_ref, wres_ref, whead_ref, bias_ref, out_ref):
    f32 = jnp.float32
    x = x_ref[...]                          # (B_pad, D)
    D = x.shape[1]
    P = D // 2
    H = wc_ref.shape[1]
    n_res = wres_ref.shape[0] // H          # 2 * levels

    # ---- single fused first-layer GEMM ---------------------------------------
    # column layout: [ x2 blocks (D*H) | raw-x (H) | dx,dy diffs (2*P*P) | pad ]
    y = jnp.dot(x, wxall_ref[...], preferred_element_type=f32)   # (B_pad, WX_N)

    # raw-x block + bias (bias is sublane-replicated -> plain vreg add)
    acc = y[:, D * H:D * H + H] + bias_ref[:, 0:H]

    # outer-product (x_i * x_j / 2) contribution; 0.5 already folded into weights
    for i in range(D):
        acc = acc + x[:, i:i + 1] * y[:, i * H:(i + 1) * H]

    # pairwise distances: dx/dy already formed by the GEMM; wc diag rows are zero
    off = D * H + H
    dxy = y[:, off:off + 2 * P * P]
    d2 = dxy * dxy
    cp = jnp.sqrt(d2[:, :P * P] + d2[:, P * P:])                 # (B_pad, P*P)
    acc = acc + jnp.dot(cp, wc_ref[...], preferred_element_type=f32)

    h = jnp.maximum(acc, 0.0)

    # ---- residual blocks ------------------------------------------------------
    for lvl in range(n_res // 2):
        hr = h
        for j in range(2):
            k = 2 * lvl + j
            w = wres_ref[k * H:(k + 1) * H, :]
            b = bias_ref[:, (1 + k) * SEG:(1 + k) * SEG + H]
            h = jnp.maximum(jnp.dot(h, w, preferred_element_type=f32) + b, 0.0)
        h = h + hr

    # ---- fused heads: one lane-dense GEMM -> [ action | value | hidden | pad ]
    bhead = bias_ref[:, (1 + n_res) * SEG:]
    out_ref[...] = jnp.dot(h, whead_ref[...], preferred_element_type=f32) + bhead


# ----------------------------- wrapper ----------------------------------------

def build_agent_forward(in_dim, hidden_dim, action_dim, value_dim, levels=2):
    D, H, A, V = in_dim, hidden_dim, action_dim, value_dim
    P = D // 2
    HEADW = pl.cdiv(A + V + H, 128) * 128
    WX_N = pl.cdiv(D * H + H + 2 * P * P, 128) * 128
    n_res = 2 * levels
    assert H <= SEG

    @jax.jit
    def forward(x, packed):
        B = x.shape[0]
        B_pad = max(8, pl.cdiv(B, 8) * 8)
        x_pad = jnp.pad(x, ((0, B_pad - B), (0, 0)))

        bias = packed["bias"]                         # (8, (1+n_res)*SEG + HEADW)
        if B_pad > 8:
            bias = jnp.tile(bias, (B_pad // 8, 1))

        vmem = pl.BlockSpec(memory_space=pltpu.MemorySpace.VMEM)

        flops = (2 * B_pad * (D * WX_N + P * P * H + n_res * H * H + H * HEADW)
                 + B_pad * (2 * D * H + 6 * P * P))
        bytes_accessed = 4 * (B_pad * D + D * WX_N + P * P * H + n_res * H * H
                              + H * HEADW + 8 * ((1 + n_res) * SEG + HEADW)
                              + B_pad * HEADW)

        out = pl.pallas_call(
            agent_kernel,
            out_shape=jax.ShapeDtypeStruct((B_pad, HEADW), jnp.float32),
            in_specs=[vmem] * 6,
            out_specs=vmem,
            cost_estimate=pl.CostEstimate(
                flops=int(flops),
                transcendentals=int(B_pad * P * P),
                bytes_accessed=int(bytes_accessed)),
        )(x_pad, packed["wxall"], packed["wc"], packed["wres"],
          packed["whead"], bias)

        action = out[:B, 0:A]
        value = out[:B, A:A + V]
        hidden = out[:B, A + V:A + V + H]
        return action, value, hidden

    return forward


# ----------------------------- parameter setup / packing -----------------------

def init_params(key, in_dim, hidden_dim, action_dim, value_dim):
    in_points = in_dim // 2
    feat_dim = in_dim + in_dim ** 2 + in_points * (in_points - 1)

    def linear(k, fan_in, fan_out):
        kw, kb = jax.random.split(k)
        scale = 1.0 / jnp.sqrt(jnp.float32(fan_in))
        w = jax.random.uniform(kw, (fan_in, fan_out), jnp.float32, -scale, scale)
        b = jax.random.uniform(kb, (1, fan_out), jnp.float32, -scale, scale)
        return w, b

    keys = jax.random.split(key, 8)
    w1, b1 = linear(keys[0], feat_dim, hidden_dim)
    r0w1, r0b1 = linear(keys[1], hidden_dim, hidden_dim)
    r0w2, r0b2 = linear(keys[2], hidden_dim, hidden_dim)
    r1w1, r1b1 = linear(keys[3], hidden_dim, hidden_dim)
    r1w2, r1b2 = linear(keys[4], hidden_dim, hidden_dim)
    wa, ba = linear(keys[5], hidden_dim, action_dim)
    wv, bv = linear(keys[6], hidden_dim, value_dim)

    return dict(
        w1=w1, b1=b1,
        r0w1=r0w1, r0b1=r0b1, r0w2=r0w2, r0b2=r0b2,
        r1w1=r1w1, r1b1=r1b1, r1w2=r1w2, r1b2=r1b2,
        wa=wa, ba=ba, wv=wv, bv=bv,
    )


def pack_params(params, in_dim, hidden_dim, action_dim, value_dim, levels=2):
    """One-time packing of the 15 logical tensors into 5 lane-dense operands."""
    assert levels == 2
    D, H, A, V = in_dim, hidden_dim, action_dim, value_dim
    P = D // 2
    HEADW = ((A + V + H + 127) // 128) * 128
    WX_N = ((D * H + H + 2 * P * P + 127) // 128) * 128
    f32 = jnp.float32
    n_res = 2 * levels

    w1 = np.asarray(params["w1"])          # (F, H) rows: raw(D) | x2(D*D) | cdist

    # -- fused first-layer weight (D, WX_N): [ x2 blocks | raw | dx,dy | 0 ] ----
    wxall = np.zeros((D, WX_N), np.float32)
    w_x2 = w1[D:D + D * D].reshape(D, D, H)                       # [i, j, h]
    # column block i holds 0.5 * W_i with K (= j) on the sublane axis
    wxall[:, 0:D * H] = 0.5 * np.transpose(w_x2, (1, 0, 2)).reshape(D, D * H)
    wxall[:, D * H:D * H + H] = w1[:D]
    # coordinate-difference columns: dx[m=p*P+j] = x[2p]-x[2j], dy likewise
    base = D * H + H
    for p in range(P):
        for j in range(P):
            m = p * P + j
            wxall[2 * p, base + m] += 1.0
            wxall[2 * j, base + m] -= 1.0
            wxall[2 * p + 1, base + P * P + m] += 1.0
            wxall[2 * j + 1, base + P * P + m] -= 1.0

    # -- cdist weight (P*P, H): off-diagonal rows scattered, diagonal rows zero -
    wc = np.zeros((P * P, H), np.float32)
    offdiag = [m for m in range(P * P) if m % (P + 1) != 0]
    wc[offdiag] = w1[D + D * D:]

    # -- residual weights stacked along sublanes: (n_res*H, H) ------------------
    wres = np.concatenate([np.asarray(params["r0w1"]), np.asarray(params["r0w2"]),
                           np.asarray(params["r1w1"]), np.asarray(params["r1w2"])],
                          axis=0)

    # -- fused head weight: [ wa | wv | I_H | 0 ]  (H, HEADW) -------------------
    whead = np.zeros((H, HEADW), np.float32)
    whead[:, 0:A] = np.asarray(params["wa"])
    whead[:, A:A + V] = np.asarray(params["wv"])
    whead[:, A + V:A + V + H] = np.eye(H, dtype=np.float32)

    # -- sublane-replicated, lane-aligned packed biases -------------------------
    bias = np.zeros((8, (1 + n_res) * SEG + HEADW), np.float32)
    bias[:, 0:H] = np.asarray(params["b1"])
    for k, name in enumerate(["r0b1", "r0b2", "r1b1", "r1b2"]):
        bias[:, (1 + k) * SEG:(1 + k) * SEG + H] = np.asarray(params[name])
    hb = (1 + n_res) * SEG
    bias[:, hb:hb + A] = np.asarray(params["ba"])
    bias[:, hb + A:hb + A + V] = np.asarray(params["bv"])

    return dict(wxall=jnp.asarray(wxall, f32), wc=jnp.asarray(wc, f32),
                wres=jnp.asarray(wres, f32), whead=jnp.asarray(whead, f32),
                bias=jnp.asarray(bias, f32))


# ----------------------------- pure-JAX reference ------------------------------

def build_complete_features(x, in_points):
    B, D = x.shape
    x2 = (x[:, None, :] * x[:, :, None]) * 0.5
    xs = x.reshape(B, in_points, 2)
    diff = xs[:, :, None, :] - xs[:, None, :, :]
    c = jnp.sqrt(jnp.sum(diff * diff, axis=-1))
    P = in_points
    c = c.reshape(B, -1)[:, 1:].reshape(B, P - 1, P + 1)[:, :, :-1].reshape(B, -1)
    return jnp.concatenate([x, x2.reshape(B, -1), c], axis=1)


def agent_forward_ref(x, params, in_points):
    feats = build_complete_features(x, in_points)
    h = jnp.maximum(feats @ params["w1"] + params["b1"], 0.0)
    for pfx in ("r0", "r1"):
        hr = h
        h = jnp.maximum(h @ params[pfx + "w1"] + params[pfx + "b1"], 0.0)
        h = jnp.maximum(h @ params[pfx + "w2"] + params[pfx + "b2"], 0.0) + hr
    return h @ params["wa"] + params["ba"], h @ params["wv"] + params["bv"], h


# ----------------------------- main --------------------------------------------

if __name__ == "__main__":
    B = 2
    in_dim = 8                 # -> in_points = 4, feature dim = 8 + 64 + 12 = 84
    hidden_dim = 32
    action_dim = 25
    value_dim = 255
    levels = 2

    key = jax.random.PRNGKey(0)
    kx, kp = jax.random.split(key)
    x = jax.random.normal(kx, (B, in_dim), jnp.float32)
    params = init_params(kp, in_dim, hidden_dim, action_dim, value_dim)
    packed = pack_params(params, in_dim, hidden_dim, action_dim, value_dim, levels)

    forward = build_agent_forward(in_dim, hidden_dim, action_dim, value_dim, levels)
    action, value, hidden = forward(x, packed)
    jax.block_until_ready((action, value, hidden))

    a_ref, v_ref, h_ref = agent_forward_ref(x, params, in_dim // 2)
    assert action.shape == (B, action_dim)
    assert value.shape == (B, value_dim)
    assert hidden.shape == (B, hidden_dim)
    assert jnp.allclose(action, a_ref, atol=1e-4, rtol=1e-4)
    assert jnp.allclose(value, v_ref, atol=1e-4, rtol=1e-4)
    assert jnp.allclose(hidden, h_ref, atol=1e-4, rtol=1e-4)

    print("KERNEL_OK")
</pallas_src>

<mosaic_0001>
module attributes {stable_mosaic.version = 11 : i64} {
  func.func @agent_kernel(%arg0: memref<8x8xf32, #tpu.memory_space<vmem>>, %arg1: memref<8x384xf32, #tpu.memory_space<vmem>>, %arg2: memref<16x32xf32, #tpu.memory_space<vmem>>, %arg3: memref<128x32xf32, #tpu.memory_space<vmem>>, %arg4: memref<32x384xf32, #tpu.memory_space<vmem>>, %arg5: memref<8x1024xf32, #tpu.memory_space<vmem>>, %arg6: memref<8x384xf32, #tpu.memory_space<vmem>>) attributes {dimension_semantics = [], scalar_prefetch = 0 : i64, scratch_operands = 0 : i64, tpu.core_type = #tpu.core_type<tc>} {
    %c0 = arith.constant 0 : index
    %c0_0 = arith.constant 0 : index
    %0 = vector.load %arg0[%c0, %c0_0] : memref<8x8xf32, #tpu.memory_space<vmem>>, vector<8x8xf32>
    %c0_1 = arith.constant 0 : index
    %c0_2 = arith.constant 0 : index
    %1 = vector.load %arg1[%c0_1, %c0_2] : memref<8x384xf32, #tpu.memory_space<vmem>>, vector<8x384xf32>
    %cst = arith.constant dense<0.000000e+00> : vector<8x384xf32>
    %2 = tpu.matmul %0, %1, %cst {dimension_numbers = #tpu.dot_dimension_numbers<[1], [0], [0], [1], [0, 0, 1, 1], [], []>} : vector<8x8xf32>, vector<8x384xf32>, vector<8x384xf32> -> vector<8x384xf32>
    %3 = vector.extract_strided_slice %2 {offsets = [0, 256], sizes = [8, 32], strides = [1, 1]} : vector<8x384xf32> to vector<8x32xf32>
    %c0_3 = arith.constant 0 : index
    %c0_4 = arith.constant 0 : index
    %4 = vector.load %arg5[%c0_3, %c0_4] : memref<8x1024xf32, #tpu.memory_space<vmem>>, vector<8x32xf32>
    %5 = arith.addf %3, %4 : vector<8x32xf32>
    %6 = vector.extract_strided_slice %0 {offsets = [0, 0], sizes = [8, 1], strides = [1, 1]} : vector<8x8xf32> to vector<8x1xf32>
    %7 = vector.extract_strided_slice %2 {offsets = [0, 0], sizes = [8, 32], strides = [1, 1]} : vector<8x384xf32> to vector<8x32xf32>
    %8 = vector.broadcast %6 : vector<8x1xf32> to vector<8x32xf32>
    %9 = arith.mulf %8, %7 : vector<8x32xf32>
    %10 = arith.addf %5, %9 : vector<8x32xf32>
    %11 = vector.extract_strided_slice %0 {offsets = [0, 1], sizes = [8, 1], strides = [1, 1]} : vector<8x8xf32> to vector<8x1xf32>
    %12 = vector.extract_strided_slice %2 {offsets = [0, 32], sizes = [8, 32], strides = [1, 1]} : vector<8x384xf32> to vector<8x32xf32>
    %13 = vector.broadcast %11 : vector<8x1xf32> to vector<8x32xf32>
    %14 = arith.mulf %13, %12 : vector<8x32xf32>
    %15 = arith.addf %10, %14 : vector<8x32xf32>
    %16 = vector.extract_strided_slice %0 {offsets = [0, 2], sizes = [8, 1], strides = [1, 1]} : vector<8x8xf32> to vector<8x1xf32>
    %17 = vector.extract_strided_slice %2 {offsets = [0, 64], sizes = [8, 32], strides = [1, 1]} : vector<8x384xf32> to vector<8x32xf32>
    %18 = vector.broadcast %16 : vector<8x1xf32> to vector<8x32xf32>
    %19 = arith.mulf %18, %17 : vector<8x32xf32>
    %20 = arith.addf %15, %19 : vector<8x32xf32>
    %21 = vector.extract_strided_slice %0 {offsets = [0, 3], sizes = [8, 1], strides = [1, 1]} : vector<8x8xf32> to vector<8x1xf32>
    %22 = vector.extract_strided_slice %2 {offsets = [0, 96], sizes = [8, 32], strides = [1, 1]} : vector<8x384xf32> to vector<8x32xf32>
    %23 = vector.broadcast %21 : vector<8x1xf32> to vector<8x32xf32>
    %24 = arith.mulf %23, %22 : vector<8x32xf32>
    %25 = arith.addf %20, %24 : vector<8x32xf32>
    %26 = vector.extract_strided_slice %0 {offsets = [0, 4], sizes = [8, 1], strides = [1, 1]} : vector<8x8xf32> to vector<8x1xf32>
    %27 = vector.extract_strided_slice %2 {offsets = [0, 128], sizes = [8, 32], strides = [1, 1]} : vector<8x384xf32> to vector<8x32xf32>
    %28 = vector.broadcast %26 : vector<8x1xf32> to vector<8x32xf32>
    %29 = arith.mulf %28, %27 : vector<8x32xf32>
    %30 = arith.addf %25, %29 : vector<8x32xf32>
    %31 = vector.extract_strided_slice %0 {offsets = [0, 5], sizes = [8, 1], strides = [1, 1]} : vector<8x8xf32> to vector<8x1xf32>
    %32 = vector.extract_strided_slice %2 {offsets = [0, 160], sizes = [8, 32], strides = [1, 1]} : vector<8x384xf32> to vector<8x32xf32>
    %33 = vector.broadcast %31 : vector<8x1xf32> to vector<8x32xf32>
    %34 = arith.mulf %33, %32 : vector<8x32xf32>
    %35 = arith.addf %30, %34 : vector<8x32xf32>
    %36 = vector.extract_strided_slice %0 {offsets = [0, 6], sizes = [8, 1], strides = [1, 1]} : vector<8x8xf32> to vector<8x1xf32>
    %37 = vector.extract_strided_slice %2 {offsets = [0, 192], sizes = [8, 32], strides = [1, 1]} : vector<8x384xf32> to vector<8x32xf32>
    %38 = vector.broadcast %36 : vector<8x1xf32> to vector<8x32xf32>
    %39 = arith.mulf %38, %37 : vector<8x32xf32>
    %40 = arith.addf %35, %39 : vector<8x32xf32>
    %41 = vector.extract_strided_slice %0 {offsets = [0, 7], sizes = [8, 1], strides = [1, 1]} : vector<8x8xf32> to vector<8x1xf32>
    %42 = vector.extract_strided_slice %2 {offsets = [0, 224], sizes = [8, 32], strides = [1, 1]} : vector<8x384xf32> to vector<8x32xf32>
    %43 = vector.broadcast %41 : vector<8x1xf32> to vector<8x32xf32>
    %44 = arith.mulf %43, %42 : vector<8x32xf32>
    %45 = arith.addf %40, %44 : vector<8x32xf32>
    %46 = vector.extract_strided_slice %2 {offsets = [0, 288], sizes = [8, 32], strides = [1, 1]} : vector<8x384xf32> to vector<8x32xf32>
    %47 = arith.mulf %46, %46 : vector<8x32xf32>
    %48 = vector.extract_strided_slice %47 {offsets = [0, 0], sizes = [8, 16], strides = [1, 1]} : vector<8x32xf32> to vector<8x16xf32>
    %49 = vector.extract_strided_slice %47 {offsets = [0, 16], sizes = [8, 16], strides = [1, 1]} : vector<8x32xf32> to vector<8x16xf32>
    %50 = arith.addf %48, %49 : vector<8x16xf32>
    %51 = math.sqrt %50 : vector<8x16xf32>
    %c0_5 = arith.constant 0 : index
    %c0_6 = arith.constant 0 : index
    %52 = vector.load %arg2[%c0_5, %c0_6] : memref<16x32xf32, #tpu.memory_space<vmem>>, vector<16x32xf32>
    %cst_7 = arith.constant dense<0.000000e+00> : vector<8x32xf32>
    %53 = tpu.matmul %51, %52, %cst_7 {dimension_numbers = #tpu.dot_dimension_numbers<[1], [0], [0], [1], [0, 0, 1, 1], [], []>} : vector<8x16xf32>, vector<16x32xf32>, vector<8x32xf32> -> vector<8x32xf32>
    %54 = arith.addf %45, %53 : vector<8x32xf32>
    %cst_8 = arith.constant 0.000000e+00 : f32
    %55 = vector.broadcast %cst_8 : f32 to vector<8x32xf32>
    %56 = arith.maximumf %54, %55 : vector<8x32xf32>
    %c0_9 = arith.constant 0 : index
    %c0_10 = arith.constant 0 : index
    %57 = vector.load %arg3[%c0_9, %c0_10] : memref<128x32xf32, #tpu.memory_space<vmem>>, vector<32x32xf32>
    %c0_11 = arith.constant 0 : index
    %c128 = arith.constant 128 : index
    %58 = vector.load %arg5[%c0_11, %c128] : memref<8x1024xf32, #tpu.memory_space<vmem>>, vector<8x32xf32>
    %cst_12 = arith.constant dense<0.000000e+00> : vector<8x32xf32>
    %59 = tpu.matmul %56, %57, %cst_12 {dimension_numbers = #tpu.dot_dimension_numbers<[1], [0], [0], [1], [0, 0, 1, 1], [], []>} : vector<8x32xf32>, vector<32x32xf32>, vector<8x32xf32> -> vector<8x32xf32>
    %60 = arith.addf %59, %58 : vector<8x32xf32>
    %cst_13 = arith.constant 0.000000e+00 : f32
    %61 = vector.broadcast %cst_13 : f32 to vector<8x32xf32>
    %62 = arith.maximumf %60, %61 : vector<8x32xf32>
    %c32 = arith.constant 32 : index
    %c0_14 = arith.constant 0 : index
    %63 = vector.load %arg3[%c32, %c0_14] : memref<128x32xf32, #tpu.memory_space<vmem>>, vector<32x32xf32>
    %c0_15 = arith.constant 0 : index
    %c256 = arith.constant 256 : index
    %64 = vector.load %arg5[%c0_15, %c256] : memref<8x1024xf32, #tpu.memory_space<vmem>>, vector<8x32xf32>
    %cst_16 = arith.constant dense<0.000000e+00> : vector<8x32xf32>
    %65 = tpu.matmul %62, %63, %cst_16 {dimension_numbers = #tpu.dot_dimension_numbers<[1], [0], [0], [1], [0, 0, 1, 1], [], []>} : vector<8x32xf32>, vector<32x32xf32>, vector<8x32xf32> -> vector<8x32xf32>
    %66 = arith.addf %65, %64 : vector<8x32xf32>
    %cst_17 = arith.constant 0.000000e+00 : f32
    %67 = vector.broadcast %cst_17 : f32 to vector<8x32xf32>
    %68 = arith.maximumf %66, %67 : vector<8x32xf32>
    %69 = arith.addf %68, %56 : vector<8x32xf32>
    %c64 = arith.constant 64 : index
    %c0_18 = arith.constant 0 : index
    %70 = vector.load %arg3[%c64, %c0_18] : memref<128x32xf32, #tpu.memory_space<vmem>>, vector<32x32xf32>
    %c0_19 = arith.constant 0 : index
    %c384 = arith.constant 384 : index
    %71 = vector.load %arg5[%c0_19, %c384] : memref<8x1024xf32, #tpu.memory_space<vmem>>, vector<8x32xf32>
    %cst_20 = arith.constant dense<0.000000e+00> : vector<8x32xf32>
    %72 = tpu.matmul %69, %70, %cst_20 {dimension_numbers = #tpu.dot_dimension_numbers<[1], [0], [0], [1], [0, 0, 1, 1], [], []>} : vector<8x32xf32>, vector<32x32xf32>, vector<8x32xf32> -> vector<8x32xf32>
    %73 = arith.addf %72, %71 : vector<8x32xf32>
    %cst_21 = arith.constant 0.000000e+00 : f32
    %74 = vector.broadcast %cst_21 : f32 to vector<8x32xf32>
    %75 = arith.maximumf %73, %74 : vector<8x32xf32>
    %c96 = arith.constant 96 : index
    %c0_22 = arith.constant 0 : index
    %76 = vector.load %arg3[%c96, %c0_22] : memref<128x32xf32, #tpu.memory_space<vmem>>, vector<32x32xf32>
    %c0_23 = arith.constant 0 : index
    %c512 = arith.constant 512 : index
    %77 = vector.load %arg5[%c0_23, %c512] : memref<8x1024xf32, #tpu.memory_space<vmem>>, vector<8x32xf32>
    %cst_24 = arith.constant dense<0.000000e+00> : vector<8x32xf32>
    %78 = tpu.matmul %75, %76, %cst_24 {dimension_numbers = #tpu.dot_dimension_numbers<[1], [0], [0], [1], [0, 0, 1, 1], [], []>} : vector<8x32xf32>, vector<32x32xf32>, vector<8x32xf32> -> vector<8x32xf32>
    %79 = arith.addf %78, %77 : vector<8x32xf32>
    %cst_25 = arith.constant 0.000000e+00 : f32
    %80 = vector.broadcast %cst_25 : f32 to vector<8x32xf32>
    %81 = arith.maximumf %79, %80 : vector<8x32xf32>
    %82 = arith.addf %81, %69 : vector<8x32xf32>
    %c0_26 = arith.constant 0 : index
    %c640 = arith.constant 640 : index
    %83 = vector.load %arg5[%c0_26, %c640] : memref<8x1024xf32, #tpu.memory_space<vmem>>, vector<8x384xf32>
    %c0_27 = arith.constant 0 : index
    %c0_28 = arith.constant 0 : index
    %84 = vector.load %arg4[%c0_27, %c0_28] : memref<32x384xf32, #tpu.memory_space<vmem>>, vector<32x384xf32>
    %cst_29 = arith.constant dense<0.000000e+00> : vector<8x384xf32>
    %85 = tpu.matmul %82, %84, %cst_29 {dimension_numbers = #tpu.dot_dimension_numbers<[1], [0], [0], [1], [0, 0, 1, 1], [], []>} : vector<8x32xf32>, vector<32x384xf32>, vector<8x384xf32> -> vector<8x384xf32>
    %86 = arith.addf %85, %83 : vector<8x384xf32>
    %c0_30 = arith.constant 0 : index
    %c0_31 = arith.constant 0 : index
    %87 = vector.load %arg6[%c0_30, %c0_31] : memref<8x384xf32, #tpu.memory_space<vmem>>, vector<8x384xf32>
    tpu.vector_store %arg6[%c0_30, %c0_31], %86 {strides = array<i32>} : memref<8x384xf32, #tpu.memory_space<vmem>>, vector<8x384xf32>,
    return
  }
}

</mosaic_0001>

<llo_original>
// kernel: forward.1
$region0: #{forward.1}
  #allocation0 [shape = 'u32[]', space=smem, size = 0x4, offset = 0x4, fixed_abs, tag = 'smem constant byte address 0x4 - core index']
  #allocation1 [shape = 'u32[72,128]{1,0:T(1,128)}', space=vmem, size = 0x9000, scoped, tag = 'internal scratch']
  %s0 = inlined_call_operand.vmem [shape: f32[8,8], index: 0, kind: input, shape index: {}]
  %s1 = inlined_call_operand.hbm [shape: f32[8,384], index: 1, kind: input, shape index: {}]
  %s2 = inlined_call_operand.hbm [shape: f32[16,32], index: 2, kind: input, shape index: {}]
  %s3 = inlined_call_operand.vmem [shape: f32[128,32], index: 3, kind: input, shape index: {}]
  %s4 = inlined_call_operand.vmem [shape: f32[32,384], index: 4, kind: input, shape index: {}]
  %s5 = inlined_call_operand.vmem [shape: f32[8,1024], index: 5, kind: input, shape index: {}]
  %s6 = inlined_call_operand.vmem [shape: f32[8,384], index: 6, kind: output, shape index: {}]
  %s7 = sld [smem:[#allocation0]]
  $region42: #{forward.1} parent=0
    _
  %s9 = ssub.s32 1, %s7
  %s10 = scalar_select 0, %s9, %s7
  $region1: #{forward.1} parent=0
    #allocation2 [shape = 'u8[12288]{0}', space=vmem, size = 0x3000, scoped, tag = 'input window, operand 1, single buffered']
    #allocation3 [shape = 's32[1]{0}', space=sflag, size = 0x4, scoped, tag = 'scoped memory for forward.1']
    #allocation4 [shape = 'u8[8192]{0}', space=vmem, size = 0x2000, scoped, tag = 'input window, operand 2, single buffered']
    #allocation5 [shape = 's32[1]{0}', space=sflag, size = 0x4, scoped, tag = 'scoped memory for forward.1']
    %11 = vsyncpa [#allocation3], 0
    %12 = vsyncpa [#allocation5], 0
    // Predicated region
    $region2: #{forward.1} parent=1 // pred_check
      _
    $region3: #{forward.1} parent=1 // pred_check_branch
      %14 = sbr.rel (0) target = $region5
    $region4: #{forward.1} parent=1 // pred_region
      _
    $region5: #{forward.1} parent=1 // pred_fallthru
      _
    // Predicated region
    $region6: #{forward.1} parent=1 // pred_check
      _
    $region7: #{forward.1} parent=1 // pred_check_branch
      %16 = sbr.rel (0) target = $region9
    $region8: #{forward.1} parent=1 // pred_region
      %18 = vsyncadd [#allocation3], 0
      %s20 = sshll.u32 %s1, 4
      %s21 = int_to_ptr.hbm [resolvable:$true] %s20
      %s22 = sshll.u32 [#allocation2], 4
      %s23 = int_to_ptr.vmem [resolvable:$true] %s22
      %25 = dma.hbm_to_vmem [thread:$0]  %s21, 384, %s23, [#allocation3]
    $region9: #{forward.1} parent=1 // pred_fallthru
      _
    // Predicated region
    $region10: #{forward.1} parent=1 // pred_check
      _
    $region11: #{forward.1} parent=1 // pred_check_branch
      %27 = sbr.rel (0) target = $region13
    $region12: #{forward.1} parent=1 // pred_region
      %29 = vsyncadd [#allocation5], 0
      %s30 = sshll.u32 %s2, 4
      %s31 = int_to_ptr.hbm [resolvable:$true] %s30
      %s32 = sshll.u32 [#allocation4], 4
      %s33 = int_to_ptr.vmem [resolvable:$true] %s32
      %38 = dma.hbm_to_vmem [thread:$0]  %s31, 256, %s33, [#allocation5], 128, 128, 8
    $region13: #{forward.1} parent=1 // pred_fallthru
      _
    // Predicated region
    $region14: #{forward.1} parent=1 // pred_check
      _
    $region15: #{forward.1} parent=1 // pred_check_branch
      %40 = sbr.rel (0) target = $region17
    $region16: #{forward.1} parent=1 // pred_region
      _
    $region17: #{forward.1} parent=1 // pred_fallthru
      _
    // Predicated region
    $region18: #{forward.1} parent=1 // pred_check
      _
    $region19: #{forward.1} parent=1 // pred_check_branch
      %42 = sbr.rel (0) target = $region21
    $region20: #{forward.1} parent=1 // pred_region
      _
    $region21: #{forward.1} parent=1 // pred_fallthru
      _
    // Predicated region
    $region22: #{forward.1} parent=1 // pred_check
      _
    $region23: #{forward.1} parent=1 // pred_check_branch
      %44 = sbr.rel (0) target = $region25
    $region24: #{forward.1} parent=1 // pred_region
      _
    $region25: #{forward.1} parent=1 // pred_fallthru
      _
    // Predicated region
    $region26: #{forward.1} parent=1 // pred_check
      _
    $region27: #{forward.1} parent=1 // pred_check_branch
      %46 = sbr.rel (0) target = $region29
    $region28: #{forward.1} parent=1 // pred_region
      %48 = dma.done [#allocation3], 384
    $region29: #{forward.1} parent=1 // pred_fallthru
      _
    // Predicated region
    $region30: #{forward.1} parent=1 // pred_check
      _
    $region31: #{forward.1} parent=1 // pred_check_branch
      %50 = sbr.rel (0) target = $region33
    $region32: #{forward.1} parent=1 // pred_region
      %52 = dma.done [#allocation5], 256
    $region33: #{forward.1} parent=1 // pred_fallthru
      _
    %v53 = vld [vmem:[%s0] sm:$0xff]
    %v54 = vld [vmem:[#allocation2] sm:$0xff]
    %v55 = vld [vmem:[#allocation2 + $0x8] sm:$0xff]
    %v56 = vld [vmem:[#allocation2 + $0x10] sm:$0xff]
    %vm57 = vcmask 64512
    %v59 = vsel %vm57, %v53, 0
    %61 = vmatpush.msra.mxu0 0.0
    %62 = vmatpush.msra.mxu0 0.0
    %63 = vmatpush.msra.mxu0 0.0
    %64 = vmatpush.msra.mxu0 0.0
    %65 = vmatpush.msra.mxu0 0.0
    %66 = vmatpush.msra.mxu0 0.0
    %67 = vmatpush.msra.mxu0 0.0
    %68 = vmatpush.msra.mxu0 0.0
    %69 = vmatpush.msra.mxu0 0.0
    %70 = vmatpush.msra.mxu0 0.0
    %71 = vmatpush.msra.mxu0 0.0
    %72 = vmatpush.msra.mxu0 0.0
    %73 = vmatpush.msra.mxu0 0.0
    %74 = vmatpush.msra.mxu0 0.0
    %75 = vmatpush.msra.mxu0 0.0
    %76 = vmatpush.msra.mxu0 %v54
    %77 = vmatmul.f32.gmra.mxu0 %v59
    %v78 = vpop.f32.mrf.mxu0
    %v79 = vadd.f32 0.0, %v78
    %80 = vdwg.mxu0
    %81 = vmatpush.msra.mxu0 0.0
    %82 = vmatpush.msra.mxu0 0.0
    %83 = vmatpush.msra.mxu0 0.0
    %84 = vmatpush.msra.mxu0 0.0
    %85 = vmatpush.msra.mxu0 0.0
    %86 = vmatpush.msra.mxu0 0.0
    %87 = vmatpush.msra.mxu0 0.0
    %88 = vmatpush.msra.mxu0 0.0
    %89 = vmatpush.msra.mxu0 0.0
    %90 = vmatpush.msra.mxu0 0.0
    %91 = vmatpush.msra.mxu0 0.0
    %92 = vmatpush.msra.mxu0 0.0
    %93 = vmatpush.msra.mxu0 0.0
    %94 = vmatpush.msra.mxu0 0.0
    %95 = vmatpush.msra.mxu0 0.0
    %96 = vmatpush.msra.mxu0 %v55
    %97 = vmatmul.f32.gmra.mxu0 %v59
    %v98 = vpop.f32.mrf.mxu0
    %v99 = vadd.f32 0.0, %v98
    %100 = vdwg.mxu0
    %101 = vmatpush.msra.mxu0 0.0
    %102 = vmatpush.msra.mxu0 0.0
    %103 = vmatpush.msra.mxu0 0.0
    %104 = vmatpush.msra.mxu0 0.0
    %105 = vmatpush.msra.mxu0 0.0
    %106 = vmatpush.msra.mxu0 0.0
    %107 = vmatpush.msra.mxu0 0.0
    %108 = vmatpush.msra.mxu0 0.0
    %109 = vmatpush.msra.mxu0 0.0
    %110 = vmatpush.msra.mxu0 0.0
    %111 = vmatpush.msra.mxu0 0.0
    %112 = vmatpush.msra.mxu0 0.0
    %113 = vmatpush.msra.mxu0 0.0
    %114 = vmatpush.msra.mxu0 0.0
    %115 = vmatpush.msra.mxu0 0.0
    %116 = vmatpush.msra.mxu0 %v56
    %117 = vmatmul.f32.gmra.mxu0 %v59
    %v118 = vpop.f32.mrf.mxu0
    %v119 = vadd.f32 0.0, %v118
    %120 = vdwg.mxu0
    %v121 = vld [vmem:[%s5] sm:$0xff]
    %v122 = vadd.f32 %v119, %v121
    %123 = vset.pattern.permute.xlu0 0
    %124 = vperm.xlu0 %123, %v53
    %v125 = vpop.permute.xlu0 %124
    %v127 = vmul.f32 %v125, %v79
    %v128 = vadd.f32 %v122, %v127
    %129 = vset.pattern.permute.xlu0 1
    %130 = vperm.xlu0 %129, %v53
    %v131 = vpop.permute.xlu0 %130
    %v133 = vmul.f32 %v131, %v79
    %135 = vrot.lane.b32.xlu0 %v133, 96
    %v136 = vpop.permute.xlu0 %135
    %v138 = vadd.f32 %v128, %v136
    %139 = vset.pattern.permute.xlu0 2
    %140 = vperm.xlu0 %139, %v53
    %v141 = vpop.permute.xlu0 %140
    %v143 = vmul.f32 %v141, %v79
    %145 = vrot.lane.b32.xlu0 %v143, 64
    %v146 = vpop.permute.xlu0 %145
    %v148 = vadd.f32 %v138, %v146
    %149 = vset.pattern.permute.xlu0 3
    %150 = vperm.xlu0 %149, %v53
    %v151 = vpop.permute.xlu0 %150
    %v153 = vmul.f32 %v151, %v79
    %155 = vrot.lane.b32.xlu0 %v153, 32
    %v156 = vpop.permute.xlu0 %155
    %v158 = vadd.f32 %v148, %v156
    %159 = vset.pattern.permute.xlu0 4
    %160 = vperm.xlu0 %159, %v53
    %v161 = vpop.permute.xlu0 %160
    %v163 = vmul.f32 %v161, %v99
    %v164 = vadd.f32 %v158, %v163
    %165 = vset.pattern.permute.xlu0 5
    %166 = vperm.xlu0 %165, %v53
    %v167 = vpop.permute.xlu0 %166
    %v169 = vmul.f32 %v167, %v99
    %171 = vrot.lane.b32.xlu0 %v169, 96
    %v172 = vpop.permute.xlu0 %171
    %v174 = vadd.f32 %v164, %v172
    %175 = vset.pattern.permute.xlu0 6
    %176 = vperm.xlu0 %175, %v53
    %v177 = vpop.permute.xlu0 %176
    %v179 = vmul.f32 %v177, %v99
    %181 = vrot.lane.b32.xlu0 %v179, 64
    %v182 = vpop.permute.xlu0 %181
    %v184 = vadd.f32 %v174, %v182
    %185 = vset.pattern.permute.xlu0 7
    %186 = vperm.xlu0 %185, %v53
    %v187 = vpop.permute.xlu0 %186
    %v189 = vmul.f32 %v187, %v99
    %191 = vrot.lane.b32.xlu0 %v189, 32
    %v192 = vpop.permute.xlu0 %191
    %v194 = vadd.f32 %v184, %v192
    %v195 = vmul.f32 %v119, %v119
    %197 = vrot.lane.b32.xlu0 %v195, 112
    %v198 = vpop.permute.xlu0 %197
    %v200 = vadd.f32 %v195, %v198
    %v201 = vrsqrt.pop %v200
    %v202 = vmul.f32 %v201, %v200
    %v203 = vmul.f32 %v202, %v201
    %v204 = vmul.f32 0.5, %v203
    %v205 = vsub.f32 1.5, %v204
    %v206 = vmul.f32 %v201, %v205
    %v207 = vmul.f32 %v200, %v206
    %vm208 = vcmp.eq.f32.partialorder %v200, inf
    %v209 = vsel %vm208, %v200, %v207
    %vm210 = vcmp.eq.f32.partialorder %v200, 0.0
    %v211 = vand.u32 %v200, 2147483648
    %v212 = vsel %vm210, %v211, %v209
    %v213 = vld [vmem:[#allocation4] sm:$0xff]
    %v214 = vld [vmem:[#allocation4 + $0x8] sm:$0xff]
    %216 = vrot.lane.b32.xlu0 %v212, 96
    %v217 = vpop.permute.xlu0 %216
    %vm218 = vcmask 130048
    %v219 = vsel %vm218, %v217, 0
    %221 = vmatpush.msra.mxu0 0.0
    %222 = vmatpush.msra.mxu0 0.0
    %223 = vmatpush.msra.mxu0 0.0
    %224 = vmatpush.msra.mxu0 0.0
    %225 = vmatpush.msra.mxu0 0.0
    %226 = vmatpush.msra.mxu0 0.0
    %227 = vmatpush.msra.mxu0 0.0
    %228 = vmatpush.msra.mxu0 0.0
    %229 = vmatpush.msra.mxu0 0.0
    %230 = vmatpush.msra.mxu0 0.0
    %231 = vmatpush.msra.mxu0 0.0
    %232 = vmatpush.msra.mxu0 0.0
    %233 = vmatpush.msra.mxu0 0.0
    %234 = vmatpush.msra.mxu0 0.0
    %235 = vmatpush.msra.mxu0 %v214
    %236 = vmatpush.msra.mxu0 %v213
    %237 = vmatmul.f32.gmra.mxu0 %v219
    %v238 = vpop.f32.mrf.mxu0
    %v239 = vadd.f32 0.0, %v238
    %240 = vdwg.mxu0
    %v241 = vadd.f32 %v194, %v239
    %v242 = vmax.f32 %v241, 0.0
    %v243 = vld [vmem:[%s3] sm:$0xff]
    %v244 = vld [vmem:[%s3 + $0x8] sm:$0xff]
    %v245 = vld [vmem:[%s3 + $0x10] sm:$0xff]
    %v246 = vld [vmem:[%s3 + $0x18] sm:$0xff]
    %v247 = vld [vmem:[%s5 + $0x8] sm:$0xff]
    %vm248 = vcmask 261120
    %v250 = vsel %vm248, %v242, 0
    %252 = vmatpush.msra.mxu0 0.0
    %253 = vmatpush.msra.mxu0 0.0
    %254 = vmatpush.msra.mxu0 0.0
    %255 = vmatpush.msra.mxu0 0.0
    %256 = vmatpush.msra.mxu0 0.0
    %257 = vmatpush.msra.mxu0 0.0
    %258 = vmatpush.msra.mxu0 0.0
    %259 = vmatpush.msra.mxu0 0.0
    %260 = vmatpush.msra.mxu0 0.0
    %261 = vmatpush.msra.mxu0 0.0
    %262 = vmatpush.msra.mxu0 0.0
    %263 = vmatpush.msra.mxu0 0.0
    %264 = vmatpush.msra.mxu0 %v246
    %265 = vmatpush.msra.mxu0 %v245
    %266 = vmatpush.msra.mxu0 %v244
    %267 = vmatpush.msra.mxu0 %v243
    %268 = vmatmul.f32.gmra.mxu0 %v250
    %v269 = vpop.f32.mrf.mxu0
    %v270 = vadd.f32 %v247, %v269
    %271 = vdwg.mxu0
    %v272 = vmax.f32 %v270, 0.0
    %v273 = vld [vmem:[%s3 + $0x20] sm:$0xff]
    %v274 = vld [vmem:[%s3 + $0x28] sm:$0xff]
    %v275 = vld [vmem:[%s3 + $0x30] sm:$0xff]
    %v276 = vld [vmem:[%s3 + $0x38] sm:$0xff]
    %v277 = vld [vmem:[%s5 + $0x10] sm:$0xff]
    %v279 = vsel %vm248, %v272, 0
    %281 = vmatpush.msra.mxu0 0.0
    %282 = vmatpush.msra.mxu0 0.0
    %283 = vmatpush.msra.mxu0 0.0
    %284 = vmatpush.msra.mxu0 0.0
    %285 = vmatpush.msra.mxu0 0.0
    %286 = vmatpush.msra.mxu0 0.0
    %287 = vmatpush.msra.mxu0 0.0
    %288 = vmatpush.msra.mxu0 0.0
    %289 = vmatpush.msra.mxu0 0.0
    %290 = vmatpush.msra.mxu0 0.0
    %291 = vmatpush.msra.mxu0 0.0
    %292 = vmatpush.msra.mxu0 0.0
    %293 = vmatpush.msra.mxu0 %v276
    %294 = vmatpush.msra.mxu0 %v275
    %295 = vmatpush.msra.mxu0 %v274
    %296 = vmatpush.msra.mxu0 %v273
    %297 = vmatmul.f32.gmra.mxu0 %v279
    %v298 = vpop.f32.mrf.mxu0
    %v299 = vadd.f32 %v277, %v298
    %300 = vdwg.mxu0
    %v301 = vmax.f32 %v299, 0.0
    %v302 = vadd.f32 %v301, %v242
    %v303 = vld [vmem:[%s3 + $0x40] sm:$0xff]
    %v304 = vld [vmem:[%s3 + $0x48] sm:$0xff]
    %v305 = vld [vmem:[%s3 + $0x50] sm:$0xff]
    %v306 = vld [vmem:[%s3 + $0x58] sm:$0xff]
    %v307 = vld [vmem:[%s5 + $0x18] sm:$0xff]
    %v309 = vsel %vm248, %v302, 0
    %311 = vmatpush.msra.mxu0 0.0
    %312 = vmatpush.msra.mxu0 0.0
    %313 = vmatpush.msra.mxu0 0.0
    %314 = vmatpush.msra.mxu0 0.0
    %315 = vmatpush.msra.mxu0 0.0
    %316 = vmatpush.msra.mxu0 0.0
    %317 = vmatpush.msra.mxu0 0.0
    %318 = vmatpush.msra.mxu0 0.0
    %319 = vmatpush.msra.mxu0 0.0
    %320 = vmatpush.msra.mxu0 0.0
    %321 = vmatpush.msra.mxu0 0.0
    %322 = vmatpush.msra.mxu0 0.0
    %323 = vmatpush.msra.mxu0 %v306
    %324 = vmatpush.msra.mxu0 %v305
    %325 = vmatpush.msra.mxu0 %v304
    %326 = vmatpush.msra.mxu0 %v303
    %327 = vmatmul.f32.gmra.mxu0 %v309
    %v328 = vpop.f32.mrf.mxu0
    %v329 = vadd.f32 %v307, %v328
    %330 = vdwg.mxu0
    %v331 = vmax.f32 %v329, 0.0
    %v332 = vld [vmem:[%s3 + $0x60] sm:$0xff]
    %v333 = vld [vmem:[%s3 + $0x68] sm:$0xff]
    %v334 = vld [vmem:[%s3 + $0x70] sm:$0xff]
    %v335 = vld [vmem:[%s3 + $0x78] sm:$0xff]
    %v336 = vld [vmem:[%s5 + $0x20] sm:$0xff]
    %v338 = vsel %vm248, %v331, 0
    %340 = vmatpush.msra.mxu0 0.0
    %341 = vmatpush.msra.mxu0 0.0
    %342 = vmatpush.msra.mxu0 0.0
    %343 = vmatpush.msra.mxu0 0.0
    %344 = vmatpush.msra.mxu0 0.0
    %345 = vmatpush.msra.mxu0 0.0
    %346 = vmatpush.msra.mxu0 0.0
    %347 = vmatpush.msra.mxu0 0.0
    %348 = vmatpush.msra.mxu0 0.0
    %349 = vmatpush.msra.mxu0 0.0
    %350 = vmatpush.msra.mxu0 0.0
    %351 = vmatpush.msra.mxu0 0.0
    %352 = vmatpush.msra.mxu0 %v335
    %353 = vmatpush.msra.mxu0 %v334
    %354 = vmatpush.msra.mxu0 %v333
    %355 = vmatpush.msra.mxu0 %v332
    %356 = vmatmul.f32.gmra.mxu0 %v338
    %v357 = vpop.f32.mrf.mxu0
    %v358 = vadd.f32 %v336, %v357
    %359 = vdwg.mxu0
    %v360 = vmax.f32 %v358, 0.0
    %v361 = vadd.f32 %v360, %v302
    %v362 = vld [vmem:[%s5 + $0x28] sm:$0xff]
    %v363 = vld [vmem:[%s5 + $0x30] sm:$0xff]
    %v364 = vld [vmem:[%s5 + $0x38] sm:$0xff]
    %v365 = vld [vmem:[%s4] sm:$0xff]
    %v366 = vld [vmem:[%s4 + $0x8] sm:$0xff]
    %v367 = vld [vmem:[%s4 + $0x10] sm:$0xff]
    %v368 = vld [vmem:[%s4 + $0x18] sm:$0xff]
    %v369 = vld [vmem:[%s4 + $0x20] sm:$0xff]
    %v370 = vld [vmem:[%s4 + $0x28] sm:$0xff]
    %v371 = vld [vmem:[%s4 + $0x30] sm:$0xff]
    %v372 = vld [vmem:[%s4 + $0x38] sm:$0xff]
    %v373 = vld [vmem:[%s4 + $0x40] sm:$0xff]
    %v374 = vld [vmem:[%s4 + $0x48] sm:$0xff]
    %v375 = vld [vmem:[%s4 + $0x50] sm:$0xff]
    %v376 = vld [vmem:[%s4 + $0x58] sm:$0xff]
    %v378 = vsel %vm248, %v361, 0
    %380 = vmatpush.msra.mxu0 0.0
    %381 = vmatpush.msra.mxu0 0.0
    %382 = vmatpush.msra.mxu0 0.0
    %383 = vmatpush.msra.mxu0 0.0
    %384 = vmatpush.msra.mxu0 0.0
    %385 = vmatpush.msra.mxu0 0.0
    %386 = vmatpush.msra.mxu0 0.0
    %387 = vmatpush.msra.mxu0 0.0
    %388 = vmatpush.msra.mxu0 0.0
    %389 = vmatpush.msra.mxu0 0.0
    %390 = vmatpush.msra.mxu0 0.0
    %391 = vmatpush.msra.mxu0 0.0
    %392 = vmatpush.msra.mxu0 %v374
    %393 = vmatpush.msra.mxu0 %v371
    %394 = vmatpush.msra.mxu0 %v368
    %395 = vmatpush.msra.mxu0 %v365
    %396 = vmatmul.f32.gmra.mxu0 %v378
    %v397 = vpop.f32.mrf.mxu0
    %v398 = vadd.f32 %v362, %v397
    %399 = vdwg.mxu0
    %400 = vmatpush.msra.mxu0 0.0
    %401 = vmatpush.msra.mxu0 0.0
    %402 = vmatpush.msra.mxu0 0.0
    %403 = vmatpush.msra.mxu0 0.0
    %404 = vmatpush.msra.mxu0 0.0
    %405 = vmatpush.msra.mxu0 0.0
    %406 = vmatpush.msra.mxu0 0.0
    %407 = vmatpush.msra.mxu0 0.0
    %408 = vmatpush.msra.mxu0 0.0
    %409 = vmatpush.msra.mxu0 0.0
    %410 = vmatpush.msra.mxu0 0.0
    %411 = vmatpush.msra.mxu0 0.0
    %412 = vmatpush.msra.mxu0 %v375
    %413 = vmatpush.msra.mxu0 %v372
    %414 = vmatpush.msra.mxu0 %v369
    %415 = vmatpush.msra.mxu0 %v366
    %416 = vmatmul.f32.gmra.mxu0 %v378
    %v417 = vpop.f32.mrf.mxu0
    %v418 = vadd.f32 %v363, %v417
    %419 = vdwg.mxu0
    %420 = vmatpush.msra.mxu0 0.0
    %421 = vmatpush.msra.mxu0 0.0
    %422 = vmatpush.msra.mxu0 0.0
    %423 = vmatpush.msra.mxu0 0.0
    %424 = vmatpush.msra.mxu0 0.0
    %425 = vmatpush.msra.mxu0 0.0
    %426 = vmatpush.msra.mxu0 0.0
    %427 = vmatpush.msra.mxu0 0.0
    %428 = vmatpush.msra.mxu0 0.0
    %429 = vmatpush.msra.mxu0 0.0
    %430 = vmatpush.msra.mxu0 0.0
    %431 = vmatpush.msra.mxu0 0.0
    %432 = vmatpush.msra.mxu0 %v376
    %433 = vmatpush.msra.mxu0 %v373
    %434 = vmatpush.msra.mxu0 %v370
    %435 = vmatpush.msra.mxu0 %v367
    %436 = vmatmul.f32.gmra.mxu0 %v378
    %v437 = vpop.f32.mrf.mxu0
    %v438 = vadd.f32 %v364, %v437
    %439 = vdwg.mxu0
    %440 = vst [vmem:[%s6] sm:$0xff] %v398
    %441 = vst [vmem:[%s6 + $0x8] sm:$0xff] %v418
    %442 = vst [vmem:[%s6 + $0x10] sm:$0xff] %v438
    // Predicated region
    $region34: #{forward.1} parent=1 // pred_check
      _
    $region35: #{forward.1} parent=1 // pred_check_branch
      %444 = sbr.rel (0) target = $region37
    $region36: #{forward.1} parent=1 // pred_region
      _
    $region37: #{forward.1} parent=1 // pred_fallthru
      _
    // Predicated region
    $region38: #{forward.1} parent=1 // pred_check
      _
    $region39: #{forward.1} parent=1 // pred_check_branch
      %446 = sbr.rel (0) target = $region41
    $region40: #{forward.1} parent=1 // pred_region
      _
    $region41: #{forward.1} parent=1 // pred_fallthru
      _
    %447 = vsyncpa [#allocation3], 1
    %448 = vsyncpa [#allocation5], 1

</llo_original>
